<compile_context>
chip_gen: v5e
topology: v5e:2x2
jax: 0.10.0
libtpu: 0.0.40
codegen_flags: <defaults>
</compile_context>

<pallas_src>
import math

import jax
import jax.numpy as jnp
from jax.experimental import pallas as pl
from jax.experimental.pallas import tpu as pltpu


def _four_linear_cat_kernel(p_ref, r_ref, out_ref):
    # p_ref:   (40, 11)  [layer*10 + out, in | bias]
    # r_ref:   (40, 11)  [layer*10 + out, R[layer, in] | 1.0]
    # out_ref: (40, 1)   y[layer*10 + out] = W[out, :] @ R[layer] + b[out]
    out_ref[...] = jnp.sum(p_ref[...] * r_ref[...], axis=-1, keepdims=True)


def model_forward(x, rand_vecs, params_packed):
    """Pallas implementation of Model.forward.

    x is accepted for signature parity with the PyTorch module but is unused
    (the original forward never reads x).
    rand_vecs    : (4, 10)  the four torch.randn(10) draws, one per layer.
    params_packed: (40, 11) [W_flat | bias], see init_params.
    """
    del x  # unused, exactly like the PyTorch module

    # Per-call prep (tiny, fused by XLA): expand R per out-row and append a
    # ones column so the bias folds into the single multiply-reduce.
    r_exp = jnp.broadcast_to(rand_vecs[:, None, :], (4, 10, 10)).reshape(40, 10)
    r_ext = jnp.concatenate([r_exp, jnp.ones((40, 1), jnp.float32)], axis=1)

    y = pl.pallas_call(
        _four_linear_cat_kernel,
        out_shape=jax.ShapeDtypeStruct((40, 1), jnp.float32),
        in_specs=[
            pl.BlockSpec(memory_space=pltpu.MemorySpace.VMEM),
            pl.BlockSpec(memory_space=pltpu.MemorySpace.VMEM),
        ],
        out_specs=pl.BlockSpec(memory_space=pltpu.MemorySpace.VMEM),
    )(params_packed, r_ext)  # (40, 1): [v1; v2; v3; v4]

    # 80-byte relayout outside the kernel (free): row 0 = [v1|v2] = v5,
    # row 1 = [v3|v4] = v6; stack as columns -> (20, 2).
    return y.reshape(2, 20).T


def init_params(key):
    """Deterministic nn.Linear(10, 10)-style init for the 4 layers.

    Returns a single packed (40, 11) buffer:
      rows  = layer*10 + out
      cols 0:10 = weight[out, in], col 10 = bias[out]
    (One-time, init-side layout plumbing; nothing happens per call.)
    """
    bound = 1.0 / math.sqrt(10.0)
    keys = jax.random.split(key, 8)
    ws, bs = [], []
    for i in range(4):
        w = jax.random.uniform(keys[2 * i], (10, 10), jnp.float32, -bound, bound)  # [out, in]
        b = jax.random.uniform(keys[2 * i + 1], (10,), jnp.float32, -bound, bound)
        ws.append(w)
        bs.append(b)
    W_flat = jnp.concatenate(ws, axis=0)              # (40, 10)
    B_flat = jnp.concatenate(bs, axis=0)[:, None]     # (40, 1)
    return jnp.concatenate([W_flat, B_flat], axis=1)  # (40, 11)


if __name__ == "__main__":
    key = jax.random.PRNGKey(0)
    k_param, k_rand, k_x = jax.random.split(key, 3)

    params = init_params(k_param)

    # the four torch.randn(10) draws, made deterministic
    R = jax.random.normal(k_rand, (4, 10), jnp.float32)

    # x is unused by the forward; give it a small plausible shape anyway
    x = jax.random.normal(k_x, (1, 10), jnp.float32)

    fwd = jax.jit(model_forward)
    out = fwd(x, R, params)
    out = jax.block_until_ready(out)

    # sanity check against a pure-JAX reference
    vs = []
    for layer in range(4):
        W_l = params[layer * 10:(layer + 1) * 10, 0:10]   # (10, 10) [out, in]
        b_l = params[layer * 10:(layer + 1) * 10, 10]     # (10,)
        vs.append(W_l @ R[layer] + b_l)
    v5 = jnp.concatenate([vs[0], vs[1]], axis=0)          # (20,)
    v6 = jnp.concatenate([vs[2], vs[3]], axis=0)          # (20,)
    ref = jnp.stack([v5, v6], axis=1)                     # (20, 2)

    assert out.shape == (20, 2)
    assert jnp.allclose(out, ref, atol=1e-5), "mismatch vs reference"

    print("KERNEL_OK")
</pallas_src>

<mosaic_0001>
module attributes {stable_mosaic.version = 11 : i64} {
  func.func @_four_linear_cat_kernel(%arg0: memref<40x11xf32, #tpu.memory_space<vmem>>, %arg1: memref<40x11xf32, #tpu.memory_space<vmem>>, %arg2: memref<40x1xf32, #tpu.memory_space<vmem>>) attributes {dimension_semantics = [], scalar_prefetch = 0 : i64, scratch_operands = 0 : i64, tpu.core_type = #tpu.core_type<tc>} {
    %c0 = arith.constant 0 : index
    %c0_0 = arith.constant 0 : index
    %0 = vector.load %arg0[%c0, %c0_0] : memref<40x11xf32, #tpu.memory_space<vmem>>, vector<40x11xf32>
    %c0_1 = arith.constant 0 : index
    %c0_2 = arith.constant 0 : index
    %1 = vector.load %arg1[%c0_1, %c0_2] : memref<40x11xf32, #tpu.memory_space<vmem>>, vector<40x11xf32>
    %2 = arith.mulf %0, %1 : vector<40x11xf32>
    %cst = arith.constant dense<0.000000e+00> : vector<40xf32>
    %3 = vector.multi_reduction <add>, %2, %cst [1] : vector<40x11xf32> to vector<40xf32>
    %4 = vector.shape_cast %3 : vector<40xf32> to vector<40x1xf32>
    %c0_3 = arith.constant 0 : index
    %c0_4 = arith.constant 0 : index
    %5 = vector.load %arg2[%c0_3, %c0_4] : memref<40x1xf32, #tpu.memory_space<vmem>>, vector<40x1xf32>
    tpu.vector_store %arg2[%c0_3, %c0_4], %4 {strides = array<i32>} : memref<40x1xf32, #tpu.memory_space<vmem>>, vector<40x1xf32>,
    return
  }
}

</mosaic_0001>

<llo_original>
// kernel: model_forward.1
$region0: #{model_forward.1}
  #allocation0 [shape = 'u32[]', space=smem, size = 0x4, offset = 0x4, fixed_abs, tag = 'smem constant byte address 0x4 - core index']
  #allocation1 [shape = 'u32[72,128]{1,0:T(1,128)}', space=vmem, size = 0x9000, scoped, tag = 'internal scratch']
  %s0 = inlined_call_operand.vmem [shape: f32[40,11], index: 0, kind: input, shape index: {}]
  %s1 = inlined_call_operand.vmem [shape: f32[40,11], index: 1, kind: input, shape index: {}]
  %s2 = inlined_call_operand.vmem [shape: f32[40,1], index: 2, kind: output, shape index: {}]
  %s3 = sld [smem:[#allocation0]]
  $region18: #{model_forward.1} parent=0
    _
  %s5 = ssub.s32 1, %s3
  %s6 = scalar_select 0, %s5, %s3
  // Predicated region
  $region2: #{model_forward.1} parent=0 // pred_check
    _
  $region3: #{model_forward.1} parent=0 // pred_check_branch
    %8 = sbr.rel (0) target = $region5
  $region4: #{model_forward.1} parent=0 // pred_region
    _
  $region5: #{model_forward.1} parent=0 // pred_fallthru
    _
  // Predicated region
  $region6: #{model_forward.1} parent=0 // pred_check
    _
  $region7: #{model_forward.1} parent=0 // pred_check_branch
    %10 = sbr.rel (0) target = $region9
  $region8: #{model_forward.1} parent=0 // pred_region
    _
  $region9: #{model_forward.1} parent=0 // pred_fallthru
    _
  %v11 = vld [vmem:[%s0] sm:$0xff]
  %v12 = vld [vmem:[%s0 + $0x8] sm:$0xff]
  %v13 = vld [vmem:[%s0 + $0x10] sm:$0xff]
  %v14 = vld [vmem:[%s0 + $0x18] sm:$0xff]
  %v15 = vld [vmem:[%s0 + $0x20] sm:$0xff]
  %v16 = vld [vmem:[%s1] sm:$0xff]
  %v17 = vld [vmem:[%s1 + $0x8] sm:$0xff]
  %v18 = vld [vmem:[%s1 + $0x10] sm:$0xff]
  %v19 = vld [vmem:[%s1 + $0x18] sm:$0xff]
  %v20 = vld [vmem:[%s1 + $0x20] sm:$0xff]
  %v21 = vmul.f32 %v11, %v16
  %v22 = vmul.f32 %v12, %v17
  %v23 = vmul.f32 %v13, %v18
  %v24 = vmul.f32 %v14, %v19
  %v25 = vmul.f32 %v15, %v20
  %vm26 = vcmask 89088
  %v27 = vsel %vm26, %v21, 0.0
  %28 = vadd.xlane.f32.xlu0 %v27
  %v29 = vpop.xlane.xlu0 %28
  %v30 = vsel %vm26, %v22, 0.0
  %31 = vadd.xlane.f32.xlu0 %v30
  %v32 = vpop.xlane.xlu0 %31
  %v33 = vsel %vm26, %v23, 0.0
  %34 = vadd.xlane.f32.xlu0 %v33
  %v35 = vpop.xlane.xlu0 %34
  %v36 = vsel %vm26, %v24, 0.0
  %37 = vadd.xlane.f32.xlu0 %v36
  %v38 = vpop.xlane.xlu0 %37
  %v39 = vsel %vm26, %v25, 0.0
  %40 = vadd.xlane.f32.xlu0 %v39
  %v41 = vpop.xlane.xlu0 %40
  %vm42 = vcmask 7168
  %43 = vst.msk [vmem:[%s2] sm:$0xff] %vm42, %v29
  %44 = vst.msk [vmem:[%s2 + $0x8] sm:$0xff] %vm42, %v32
  %45 = vst.msk [vmem:[%s2 + $0x10] sm:$0xff] %vm42, %v35
  %46 = vst.msk [vmem:[%s2 + $0x18] sm:$0xff] %vm42, %v38
  %47 = vst.msk [vmem:[%s2 + $0x20] sm:$0xff] %vm42, %v41
  // Predicated region
  $region10: #{model_forward.1} parent=0 // pred_check
    _
  $region11: #{model_forward.1} parent=0 // pred_check_branch
    %49 = sbr.rel (0) target = $region13
  $region12: #{model_forward.1} parent=0 // pred_region
    _
  $region13: #{model_forward.1} parent=0 // pred_fallthru
    _
  // Predicated region
  $region14: #{model_forward.1} parent=0 // pred_check
    _
  $region15: #{model_forward.1} parent=0 // pred_check_branch
    %51 = sbr.rel (0) target = $region17
  $region16: #{model_forward.1} parent=0 // pred_region
    _
  $region17: #{model_forward.1} parent=0 // pred_fallthru
    _

</llo_original>
